<compile_context>
chip_gen: v6e
topology: v6e:2x2x1
jax: 0.10.0
libtpu: 0.0.40
codegen_flags: <defaults>
</compile_context>

<pallas_src>
import jax
import jax.numpy as jnp
from jax import lax
from jax.experimental import pallas as pl
from jax.experimental.pallas import tpu as pltpu


def linear_kernel(x_ref, w_ref, b_ref, o_ref):
    # MXU matmul: contract last dims of both operands (K = indim), no transpose.
    acc = lax.dot_general(
        x_ref[...],                      # (tb, indim)
        w_ref[...],                      # (outdim, indim)
        dimension_numbers=(((1,), (1,)), ((), ())),
        preferred_element_type=jnp.float32,
    )                                    # (tb, outdim), f32 accumulate
    o_ref[...] = (acc + b_ref[...]).astype(o_ref.dtype)


def _round_up(n, m):
    return ((n + m - 1) // m) * m


def base_linear(x, weight, bias, *, tile_b=8192, vmem_limit_bytes=32 << 20):
    B, indim = x.shape
    outdim, _ = weight.shape
    bias2d = bias.reshape(1, outdim)     # keep 2D for TPU-friendly layout

    # Sublane granularity is dtype-dependent (f32: 8, bf16: 16, int8/fp8: 32).
    sub = {4: 8, 2: 16, 1: 32}.get(jnp.dtype(x.dtype).itemsize, 8)

    # Batch tile: multiple of the sublane granularity, no larger than needed.
    tb = min(_round_up(tile_b, sub), _round_up(B, sub))

    # VMEM budget with 128-lane padding: x block and out block each occupy
    # tb * 128 * itemsize bytes, each double-buffered.
    itemsize = jnp.dtype(x.dtype).itemsize

    def step_bytes(t):
        return 2 * 2 * t * 128 * itemsize        # {x, out} x {2 buffers}

    budget = vmem_limit_bytes - (2 << 20)        # headroom: weight/bias/scratch
    while tb > sub and step_bytes(tb) > budget:
        tb = _round_up(tb // 2, sub)

    grid = (pl.cdiv(B, tb),)                     # partial last block is masked

    cost = pl.CostEstimate(
        flops=2 * B * indim * outdim,
        transcendentals=0,
        bytes_accessed=(x.size + weight.size + bias.size + B * outdim) * itemsize,
    )

    out = pl.pallas_call(
        linear_kernel,
        out_shape=jax.ShapeDtypeStruct((B, outdim), x.dtype),
        grid_spec=pl.GridSpec(
            grid=grid,
            in_specs=[
                # x: one (tb, indim) slab per grid step (double-buffered DMA).
                pl.BlockSpec((tb, indim), lambda i: (i, 0)),
                # weight / bias: constant index_map -> loaded once, VMEM-resident.
                pl.BlockSpec((outdim, indim), lambda i: (0, 0)),
                pl.BlockSpec((1, outdim), lambda i: (0, 0)),
            ],
            out_specs=pl.BlockSpec((tb, outdim), lambda i: (i, 0)),
        ),
        compiler_params=pltpu.CompilerParams(
            # Independent batch tiles -> shard across TensorCores on v7x.
            dimension_semantics=("parallel",),
            vmem_limit_bytes=vmem_limit_bytes,
        ),
        cost_estimate=cost,
    )(x, weight, bias2d)

    return out


if __name__ == "__main__":
    indim, outdim, batch = 48, 12, 8

    key = jax.random.PRNGKey(0)
    kx, kw, kb, kx2 = jax.random.split(key, 4)

    # Deterministic param init mimicking torch.nn.Linear default:
    # U(-1/sqrt(indim), 1/sqrt(indim)) for both weight and bias.
    bound = 1.0 / (indim ** 0.5)
    weight = jax.random.uniform(kw, (outdim, indim), jnp.float32, -bound, bound)
    bias = jax.random.uniform(kb, (outdim,), jnp.float32, -bound, bound)

    # Small case (single, partially-filled tile: B=8 < tb).
    x = jax.random.normal(kx, (batch, indim), jnp.float32)
    out = jax.block_until_ready(base_linear(x, weight, bias))
    ref = x @ weight.T + bias
    assert out.shape == (batch, outdim)
    assert jnp.allclose(out, ref, atol=1e-5, rtol=1e-5)

    # Larger case exercising grid > 1 with a ragged (partial) last block:
    # B=1030, tb=512 -> grid=3, last block covers only 6 valid rows.
    big_batch = 1030
    x2 = jax.random.normal(kx2, (big_batch, indim), jnp.float32)
    out2 = jax.block_until_ready(base_linear(x2, weight, bias, tile_b=512))
    ref2 = x2 @ weight.T + bias
    assert out2.shape == (big_batch, outdim)
    assert jnp.allclose(out2, ref2, atol=1e-5, rtol=1e-5)

    # Same big case with the default (large) tile to cover the single-big-tile path.
    out3 = jax.block_until_ready(base_linear(x2, weight, bias))
    assert jnp.allclose(out3, ref2, atol=1e-5, rtol=1e-5)

    print("KERNEL_OK")
</pallas_src>

<mosaic_0001>
module attributes {stable_mosaic.version = 11 : i64} {
  func.func @linear_kernel(%arg0: i32, %arg1: memref<8x48xf32, #tpu.memory_space<vmem>>, %arg2: memref<12x48xf32, #tpu.memory_space<vmem>>, %arg3: memref<1x12xf32, #tpu.memory_space<vmem>>, %arg4: memref<8x12xf32, #tpu.memory_space<vmem>>) attributes {dimension_semantics = [#tpu.dimension_semantics<parallel>], iteration_bounds = array<i64: 1>, scalar_prefetch = 0 : i64, scratch_operands = 0 : i64, tpu.core_type = #tpu.core_type<tc>, window_params = [{transform_indices = @transform_0, window_bounds = array<i64: 8, 48>}, {pipeline_mode = #tpu.pipeline_mode<synchronous>, transform_indices = @transform_1, window_bounds = array<i64: 12, 48>}, {pipeline_mode = #tpu.pipeline_mode<synchronous>, transform_indices = @transform_2, window_bounds = array<i64: 1, 12>}, {transform_indices = @transform_3, window_bounds = array<i64: 8, 12>}]} {
    %c0 = arith.constant 0 : index
    %c0_0 = arith.constant 0 : index
    %0 = vector.load %arg1[%c0, %c0_0] : memref<8x48xf32, #tpu.memory_space<vmem>>, vector<8x48xf32>
    %c0_1 = arith.constant 0 : index
    %c0_2 = arith.constant 0 : index
    %1 = vector.load %arg2[%c0_1, %c0_2] : memref<12x48xf32, #tpu.memory_space<vmem>>, vector<12x48xf32>
    %cst = arith.constant dense<0.000000e+00> : vector<8x12xf32>
    %2 = tpu.matmul %0, %1, %cst {dimension_numbers = #tpu.dot_dimension_numbers<[1], [1], [0], [0], [0, 0, 1, 0], [], []>} : vector<8x48xf32>, vector<12x48xf32>, vector<8x12xf32> -> vector<8x12xf32>
    %c0_3 = arith.constant 0 : index
    %c0_4 = arith.constant 0 : index
    %3 = vector.load %arg3[%c0_3, %c0_4] : memref<1x12xf32, #tpu.memory_space<vmem>>, vector<1x12xf32>
    %4 = vector.broadcast %3 : vector<1x12xf32> to vector<8x12xf32>
    %5 = arith.addf %2, %4 : vector<8x12xf32>
    %c0_5 = arith.constant 0 : index
    %c0_6 = arith.constant 0 : index
    %6 = vector.load %arg4[%c0_5, %c0_6] : memref<8x12xf32, #tpu.memory_space<vmem>>, vector<8x12xf32>
    tpu.vector_store %arg4[%c0_5, %c0_6], %5 {strides = array<i32>} : memref<8x12xf32, #tpu.memory_space<vmem>>, vector<8x12xf32>,
    return
  }
  func.func @transform_0(%arg0: i32) -> (i32, i32) {
    %c0_i32 = arith.constant 0 : i32
    %c0_i32_0 = arith.constant 0 : i32
    return %arg0, %c0_i32 : i32, i32
  }
  func.func @transform_1(%arg0: i32) -> (i32, i32) {
    %c0_i32 = arith.constant 0 : i32
    %c0_i32_0 = arith.constant 0 : i32
    %c0_i32_1 = arith.constant 0 : i32
    return %c0_i32, %c0_i32_0 : i32, i32
  }
  func.func @transform_2(%arg0: i32) -> (i32, i32) {
    %c0_i32 = arith.constant 0 : i32
    %c0_i32_0 = arith.constant 0 : i32
    %c0_i32_1 = arith.constant 0 : i32
    return %c0_i32, %c0_i32_0 : i32, i32
  }
  func.func @transform_3(%arg0: i32) -> (i32, i32) {
    %c0_i32 = arith.constant 0 : i32
    %c0_i32_0 = arith.constant 0 : i32
    return %arg0, %c0_i32 : i32, i32
  }
}

</mosaic_0001>

<llo_original>
// kernel: tpu_custom_call.1
$region0: #{tpu_custom_call.1}
  #allocation0 [shape = 'u32[]', space=smem, size = 0x4, offset = 0x4, fixed_abs, tag = 'smem constant byte address 0x4 - core index']
  #allocation1 [shape = 'u32[144,128]{1,0:T(1,128)}', space=vmem, size = 0x12000, scoped, tag = 'internal scratch']
  %s0 = inlined_call_operand.hbm [shape: f32[8,48], index: 0, kind: input, shape index: {}]
  %s1 = inlined_call_operand.hbm [shape: f32[12,48], index: 1, kind: input, shape index: {}]
  %s2 = inlined_call_operand.vmem [shape: f32[1,12], index: 2, kind: input, shape index: {}]
  %s3 = inlined_call_operand.hbm [shape: f32[8,12], index: 3, kind: output, shape index: {}]
  %s4 = sld [smem:[#allocation0]]
  $region30: #{tpu_custom_call.1} parent=0
    _
  %s6 = ssub.s32 1, %s4
  %s7 = scalar_select 0, %s6, %s4
  $region1: #{tpu_custom_call.1} parent=0
    #allocation2 [shape = 'u8[4096]{0}', space=vmem, size = 0x1000, scoped, tag = 'input window, operand 0, single buffered']
    #allocation3 [shape = 's32[1]{0}', space=sflag, size = 0x4, scoped, tag = 'scoped memory for tpu_custom_call.1']
    #allocation4 [shape = 's32[1]{0}', space=sflag, size = 0x4, scoped, tag = 'scoped memory for tpu_custom_call.1']
    #allocation5 [shape = 'u8[8192]{0}', space=vmem, size = 0x2000, scoped, tag = 'input window, operand 1, single buffered']
    #allocation6 [shape = 's32[1]{0}', space=sflag, size = 0x4, scoped, tag = 'scoped memory for tpu_custom_call.1']
    #allocation7 [shape = 'u8[4096]{0}', space=vmem, size = 0x1000, scoped, tag = 'output window, operand 0, single buffered']
    %8 = vsyncpa [#allocation3], 0
    %9 = vsyncpa [#allocation6], 0
    %10 = vsyncpa [#allocation4], 0
    // Predicated region
    $region2: #{tpu_custom_call.1} parent=1 // pred_check
      _
    $region3: #{tpu_custom_call.1} parent=1 // pred_check_branch
      %12 = sbr.rel (0) target = $region5
    $region4: #{tpu_custom_call.1} parent=1 // pred_region
      %s14 = ssub.s32 128, 128
      %15 = vsyncadd [#allocation3], %s14
      %s17 = sshll.u32 [#allocation2], 4
      %s18 = int_to_ptr.vmem [resolvable:$true] %s17
      %20 = dma.hbm_to_vmem [thread:$0]  %s0, 128, %s18, [#allocation3]
    $region5: #{tpu_custom_call.1} parent=1 // pred_fallthru
      _
    // Predicated region
    $region6: #{tpu_custom_call.1} parent=1 // pred_check
      _
    $region7: #{tpu_custom_call.1} parent=1 // pred_check_branch
      %22 = sbr.rel (0) target = $region9
    $region8: #{tpu_custom_call.1} parent=1 // pred_region
      %s24 = ssub.s32 256, 256
      %25 = vsyncadd [#allocation6], %s24
      %s26 = sshll.u32 [#allocation5], 4
      %s27 = int_to_ptr.vmem [resolvable:$true] %s26
      %32 = dma.hbm_to_vmem [thread:$0]  %s1, 256, %s27, [#allocation6], 128, 128, 8
    $region9: #{tpu_custom_call.1} parent=1 // pred_fallthru
      _
    // Predicated region
    $region10: #{tpu_custom_call.1} parent=1 // pred_check
      _
    $region11: #{tpu_custom_call.1} parent=1 // pred_check_branch
      %34 = sbr.rel (0) target = $region13
    $region12: #{tpu_custom_call.1} parent=1 // pred_region
      _
    $region13: #{tpu_custom_call.1} parent=1 // pred_fallthru
      _
    // Predicated region
    $region14: #{tpu_custom_call.1} parent=1 // pred_check
      _
    $region15: #{tpu_custom_call.1} parent=1 // pred_check_branch
      %36 = sbr.rel (0) target = $region17
    $region16: #{tpu_custom_call.1} parent=1 // pred_region
      %37 = dma.done [#allocation3], 128
    $region17: #{tpu_custom_call.1} parent=1 // pred_fallthru
      _
    // Predicated region
    $region18: #{tpu_custom_call.1} parent=1 // pred_check
      _
    $region19: #{tpu_custom_call.1} parent=1 // pred_check_branch
      %39 = sbr.rel (0) target = $region21
    $region20: #{tpu_custom_call.1} parent=1 // pred_region
      %40 = dma.done [#allocation6], 256
    $region21: #{tpu_custom_call.1} parent=1 // pred_fallthru
      _
    %v41 = vld [vmem:[#allocation2] sm:$0xff]
    %v42 = vld [vmem:[#allocation5] sm:$0xff]
    %v43 = vld [vmem:[#allocation5 + $0x8] sm:$0xf]
    %v44 = vld [vmem:[%s2] sm:$0x1]
    %v46 = vlaneseq
    %v47 = vshrl.u32 %v46, 7
    %v48 = vsub.s32 0, %v47
    %v49 = vrot.slane %v44, %v48
    %vm51 = vcmask 392192
    %v53 = vsel %vm51, %v41, 0
    %v56 = vsel %vm51, %v42, 0
    %v59 = vsel %vm51, %v43, 0
    %61 = vmatprep.subr.mxu0 0.0
    %62 = vmatpush1.xpose.msra.mxu0 0.0
    %63 = vmatprep.subr.mxu0 0.0
    %64 = vmatpush1.xpose.msra.mxu0 0.0
    %65 = vmatprep.subr.mxu0 0.0
    %66 = vmatpush1.xpose.msra.mxu0 0.0
    %67 = vmatprep.subr.mxu0 0.0
    %68 = vmatpush1.xpose.msra.mxu0 0.0
    %69 = vmatprep.subr.mxu0 0.0
    %70 = vmatpush1.xpose.msra.mxu0 0.0
    %71 = vmatprep.subr.mxu0 0.0
    %72 = vmatpush1.xpose.msra.mxu0 0.0
    %73 = vmatprep.subr.mxu0 0.0
    %74 = vmatpush1.xpose.msra.mxu0 0.0
    %75 = vmatprep.subr.mxu0 0.0
    %76 = vmatpush1.xpose.msra.mxu0 0.0
    %77 = vmatprep.subr.mxu0 0.0
    %78 = vmatpush1.xpose.msra.mxu0 0.0
    %79 = vmatprep.subr.mxu0 0.0
    %80 = vmatpush1.xpose.msra.mxu0 0.0
    %81 = vmatprep.subr.mxu0 0.0
    %82 = vmatpush1.xpose.msra.mxu0 0.0
    %83 = vmatprep.subr.mxu0 0.0
    %84 = vmatpush1.xpose.msra.mxu0 0.0
    %85 = vmatprep.subr.mxu0 0.0
    %86 = vmatpush1.xpose.msra.mxu0 0.0
    %87 = vmatprep.subr.mxu0 0.0
    %88 = vmatpush1.xpose.msra.mxu0 0.0
    %89 = vmatprep.subr.mxu0 0.0
    %90 = vmatpush1.xpose.msra.mxu0 %v59
    %91 = vmatprep.subr.mxu0 0.0
    %92 = vmatpush1.xpose.msra.mxu0 %v56
    %93 = vmatprep.subr.mxu0 0.0
    %94 = vmatpush2.xpose.msra.mxu0 0.0
    %95 = vmatprep.subr.mxu0 0.0
    %96 = vmatpush2.xpose.msra.mxu0 0.0
    %97 = vmatprep.subr.mxu0 0.0
    %98 = vmatpush2.xpose.msra.mxu0 0.0
    %99 = vmatprep.subr.mxu0 0.0
    %100 = vmatpush2.xpose.msra.mxu0 0.0
    %101 = vmatprep.subr.mxu0 0.0
    %102 = vmatpush2.xpose.msra.mxu0 0.0
    %103 = vmatprep.subr.mxu0 0.0
    %104 = vmatpush2.xpose.msra.mxu0 0.0
    %105 = vmatprep.subr.mxu0 0.0
    %106 = vmatpush2.xpose.msra.mxu0 0.0
    %107 = vmatprep.subr.mxu0 0.0
    %108 = vmatpush2.xpose.msra.mxu0 0.0
    %109 = vmatprep.subr.mxu0 0.0
    %110 = vmatpush2.xpose.msra.mxu0 0.0
    %111 = vmatprep.subr.mxu0 0.0
    %112 = vmatpush2.xpose.msra.mxu0 0.0
    %113 = vmatprep.subr.mxu0 0.0
    %114 = vmatpush2.xpose.msra.mxu0 0.0
    %115 = vmatprep.subr.mxu0 0.0
    %116 = vmatpush2.xpose.msra.mxu0 0.0
    %117 = vmatprep.subr.mxu0 0.0
    %118 = vmatpush2.xpose.msra.mxu0 0.0
    %119 = vmatprep.subr.mxu0 0.0
    %120 = vmatpush2.xpose.msra.mxu0 0.0
    %121 = vmatprep.subr.mxu0 0.0
    %122 = vmatpush2.xpose.msra.mxu0 0.0
    %123 = vmatprep.subr.mxu0 0.0
    %124 = vmatpush2.xpose.msra.mxu0 0.0
    %125 = vmatprep.mubr.f32.mxu0 0.0
    %126 = vmatmul.mubr.f32.gmra.mxu0 %v53
    %v127 = vpop.f32.mrf.mxu0
    %v128 = vadd.f32 %v49, %v127
    %v129 = vpop.f32.mrf.mxu0
    %130 = vdwg.mxu0
    %vm131 = vcmask 97280
    %132 = vst.msk [vmem:[#allocation7] sm:$0xff] %vm131, %v128
    // Predicated region
    $region22: #{tpu_custom_call.1} parent=1 // pred_check
      _
    $region23: #{tpu_custom_call.1} parent=1 // pred_check_branch
      %134 = sbr.rel (0) target = $region25
    $region24: #{tpu_custom_call.1} parent=1 // pred_region
      %s136 = ssub.s32 128, 128
      %137 = vsyncadd [#allocation4], %s136
      %s139 = sshll.u32 [#allocation7], 4
      %s140 = int_to_ptr.vmem [resolvable:$true] %s139
      %142 = dma.vmem_to_hbm [thread:$0]  %s140, 128, %s3, [#allocation4]
    $region25: #{tpu_custom_call.1} parent=1 // pred_fallthru
      _
    // Predicated region
    $region26: #{tpu_custom_call.1} parent=1 // pred_check
      _
    $region27: #{tpu_custom_call.1} parent=1 // pred_check_branch
      %144 = sbr.rel (0) target = $region29
    $region28: #{tpu_custom_call.1} parent=1 // pred_region
      %145 = dma.done [#allocation4], 128
    $region29: #{tpu_custom_call.1} parent=1 // pred_fallthru
      _
    %146 = vsyncpa [#allocation3], 1
    %147 = vsyncpa [#allocation6], 1
    %148 = vsyncpa [#allocation4], 1

</llo_original>
